<compile_context>
chip_gen: v7x
topology: tpu7x:2x2x1
jax: 0.10.0
libtpu: 0.0.40
codegen_flags: <defaults>
</compile_context>

<pallas_src>
import math
import numpy as np
import jax
import jax.numpy as jnp
from jax import lax
from jax.experimental import pallas as pl
from jax.experimental.pallas import tpu as pltpu


def _make_group_mix_kernel(kin, use_mxu):
    def kernel(x_ref, w_ref, o_ref):
        # x_ref: (1, 1, KIN, Lt)  VMEM -- patch-phase planes, lane-dense spatial tile
        # w_ref: (1, KOUT, KIN)   VMEM -- this group's mixing matrix
        # o_ref: (1, 1, KOUT, Lt) VMEM -- all KOUT output planes as one slab store
        x = x_ref[0, 0].astype(jnp.float32)   # (KIN, Lt): each plane loaded/cast once
        w = w_ref[0].astype(jnp.float32)      # (KOUT, KIN)
        if use_mxu:
            # scale >= 2 (KIN >= 8): route the ks^2 x ks^2 mixing through the MXU,
            # freeing the VALU slots so the kernel stays HBM-bound.
            y = jnp.dot(w, x, preferred_element_type=jnp.float32)
        else:
            # scale == 1 (KIN == 4): cheap VPU outer-product accumulate (well under
            # the mem/VALU crossover); inputs are hoisted out of the output loop.
            y = w[:, 0:1] * x[0:1, :]
            for k in range(1, kin):
                y = y + w[:, k:k + 1] * x[k:k + 1, :]
        o_ref[0, 0] = y.astype(o_ref.dtype)
    return kernel


def _choose_lane_tile(L, kin, kout, itemsize):
    """Largest multiple-of-128 divisor of L whose (double-buffered) input+output
    blocks stay within a conservative VMEM budget (sized so the same tiling is
    safe on v7x's 64 MiB VMEM / 32 MiB scoped default as well as v5e/v6e)."""
    if L % 128 != 0:
        # Small / oddly sized images: use the full flattened spatial extent
        # (block dim == full array dim is always legal).
        # TODO(synk): pad L up to a multiple of 128 for large non-divisible images.
        return L
    budget_bytes = 8 * 1024 * 1024                     # x-block + o-block, x2 buffers
    max_lt = budget_bytes // ((kin + kout) * itemsize * 2)
    max_lt = max(128, min(max_lt, L))
    best = 128
    for cand in range(128, L + 1, 128):
        if L % cand == 0 and cand <= max_lt:
            best = cand
    return best


def _group_mix(x_p, w_g, *, lane_tile=None):
    """x_p: (N, G, KIN, L), w_g: (G, KOUT, KIN) -> (N, G, KOUT, L)."""
    N, G, KIN, L = x_p.shape
    KOUT = w_g.shape[1]
    Lt = lane_tile if lane_tile is not None else _choose_lane_tile(
        L, KIN, KOUT, x_p.dtype.itemsize)
    assert L % Lt == 0, (L, Lt)
    kernel = _make_group_mix_kernel(KIN, use_mxu=(KIN >= 8))
    return pl.pallas_call(
        kernel,
        out_shape=jax.ShapeDtypeStruct((N, G, KOUT, L), x_p.dtype),
        grid=(N, G, L // Lt),
        in_specs=[
            pl.BlockSpec((1, 1, KIN, Lt), lambda n, g, l: (n, g, 0, l)),
            pl.BlockSpec((1, KOUT, KIN), lambda n, g, l: (g, 0, 0)),
        ],
        out_specs=pl.BlockSpec((1, 1, KOUT, Lt), lambda n, g, l: (n, g, 0, l)),
        compiler_params=pltpu.CompilerParams(
            dimension_semantics=("parallel", "parallel", "parallel")),
    )(x_p, w_g)


def wavelet_transform(x, weight, *, scale=1, dec=True, transpose=True, groups=1,
                      lane_tile=None):
    """Forward pass of WaveletTransform.

    `weight` has the PyTorch layout (groups*ks*ks, 1, ks, ks) for both the
    Conv2d (dec=True) and ConvTranspose2d (dec=False) cases.
    """
    ks = 2 ** scale
    ks2 = ks * ks
    w_g = weight.reshape(groups, ks2, ks2)             # [g, o, p*ks+q]

    if dec:
        N, C, H, W = x.shape
        assert C == groups
        # PyTorch Conv2d with stride=ks silently floors; require divisibility here.
        assert H % ks == 0 and W % ks == 0, "dec=True requires H, W divisible by 2**scale"
        Ho, Wo = H // ks, W // ks
        L = Ho * Wo
        # NCHW -> lane-dense patch-major (N, G, ks*ks, Ho*Wo).
        # TODO(synk): this host-side transpose is one extra HBM read+write of x;
        # folding the phase split into the kernel's input DMA would remove it.
        x_p = x.reshape(N, groups, Ho, ks, Wo, ks)
        x_p = x_p.transpose(0, 1, 3, 5, 2, 4).reshape(N, groups, ks2, L)
        out = _group_mix(x_p, w_g, lane_tile=lane_tile)          # (N, G, ks2, L)
        out = out.reshape(N, groups * ks2, Ho, Wo)               # contiguous -> free
        # `transpose=True` view(N,1,C,Ho,Wo).transpose(1,2).view(...) is an identity.
        return out
    else:
        # `transpose=True` pre-reshape in the PyTorch code is also an identity.
        N, C, Hi, Wi = x.shape
        assert C == groups * ks2
        L = Hi * Wi
        x_p = x.reshape(N, groups, ks2, L)                       # contiguous -> free
        w_t = jnp.swapaxes(w_g, 1, 2)                            # [g, p*ks+q, o]
        out = _group_mix(x_p, w_t, lane_tile=lane_tile)          # (N, G, ks2, L)
        # Un-patch back to NCHW.
        # TODO(synk): this post-kernel transpose is one extra HBM pass; it could be
        # folded into the kernel's store path (interleaved lane scatter / bitcast
        # pair-packing for ks=2) at the cost of a more complex output BlockSpec.
        out = out.reshape(N, groups, ks, ks, Hi, Wi)
        out = out.transpose(0, 1, 4, 2, 5, 3).reshape(N, groups, Hi * ks, Wi * ks)
        return out


def make_haar_weights(scale, groups):
    """Deterministic orthonormal (Haar/Hadamard) wavelet filters, PyTorch layout."""
    ks = 2 ** scale
    h = np.array([[1.0]])
    while h.shape[0] < ks:
        h = np.kron(h, np.array([[1.0, 1.0], [1.0, -1.0]])) / math.sqrt(2.0)
    # 2D separable filters: filt[a*ks+b, 0, p, q] = h[a, p] * h[b, q]
    filt = np.einsum('ap,bq->abpq', h, h).reshape(ks * ks, 1, ks, ks)
    w = np.tile(filt, (groups, 1, 1, 1))                 # (groups*ks*ks, 1, ks, ks)
    # deterministic per-group scaling so grouped indexing is actually exercised
    gscales = 1.0 + 0.1 * np.arange(groups)
    w = w * np.repeat(gscales, ks * ks)[:, None, None, None]
    return jnp.asarray(w, jnp.float32), jnp.asarray(gscales, jnp.float32)


if __name__ == "__main__":
    key = jax.random.PRNGKey(0)
    N, groups = 2, 4

    # (scale, H, W, lane_tile, dec_tol, rec_tol):
    #   scale=1, 16x16        -> VPU path, full-extent spatial block
    #   scale=2, 64x64        -> MXU matmul path (looser tol for MXU f32 rounding)
    #   scale=1, 64x64, Lt256 -> multi-tile lane-dense spatial blocking
    cases = [
        (1, 16, 16, None, 1e-5, 1e-4),
        (2, 64, 64, None, 1e-2, 2e-2),
        (1, 64, 64, 256, 1e-5, 1e-4),
    ]
    for idx, (scale, H, W, lane_tile, dec_tol, rec_tol) in enumerate(cases):
        ks = 2 ** scale
        kcase = jax.random.fold_in(key, idx)
        x = jax.random.normal(kcase, (N, groups, H, W), dtype=jnp.float32)
        weight, gscales = make_haar_weights(scale, groups)

        # --- dec=True: Conv2d(groups, groups*ks*ks, ks, stride=ks, groups=groups) ---
        y = wavelet_transform(x, weight, scale=scale, dec=True, transpose=True,
                              groups=groups, lane_tile=lane_tile)
        y = jax.block_until_ready(y)
        assert y.shape == (N, groups * ks * ks, H // ks, W // ks)
        y_ref = lax.conv_general_dilated(
            x, weight, window_strides=(ks, ks), padding='VALID',
            dimension_numbers=('NCHW', 'OIHW', 'NCHW'), feature_group_count=groups)
        np.testing.assert_allclose(np.asarray(y), np.asarray(y_ref),
                                   rtol=dec_tol, atol=dec_tol)

        # --- dec=False: ConvTranspose2d(groups*ks*ks, groups, ks, stride=ks, groups) ---
        xr = wavelet_transform(y, weight, scale=scale, dec=False, transpose=True,
                               groups=groups, lane_tile=lane_tile)
        xr = jax.block_until_ready(xr)
        # Haar filters are orthonormal, so rec(dec(x)) == (per-group scale)^2 * x
        expected = np.asarray(x) * np.asarray(gscales ** 2)[None, :, None, None]
        np.testing.assert_allclose(np.asarray(xr), expected,
                                   rtol=rec_tol, atol=rec_tol)

    print("KERNEL_OK")
</pallas_src>

<mosaic_0001>
module attributes {stable_mosaic.version = 11 : i64} {
  func.func @kernel(%arg0: i32, %arg1: i32, %arg2: i32, %arg3: memref<1x1x4x64xf32, #tpu.memory_space<vmem>>, %arg4: memref<1x4x4xf32, #tpu.memory_space<vmem>>, %arg5: memref<1x1x4x64xf32, #tpu.memory_space<vmem>>) attributes {dimension_semantics = [#tpu.dimension_semantics<parallel>, #tpu.dimension_semantics<parallel>, #tpu.dimension_semantics<parallel>], iteration_bounds = array<i64: 2, 4, 1>, scalar_prefetch = 0 : i64, scratch_operands = 0 : i64, tpu.core_type = #tpu.core_type<tc>, window_params = [{transform_indices = @transform_0, window_bounds = array<i64: 1, 1, 4, 64>}, {transform_indices = @transform_1, window_bounds = array<i64: 1, 4, 4>}, {transform_indices = @transform_2, window_bounds = array<i64: 1, 1, 4, 64>}]} {
    %c0 = arith.constant 0 : index
    %c0_0 = arith.constant 0 : index
    %c0_1 = arith.constant 0 : index
    %c0_2 = arith.constant 0 : index
    %0 = vector.load %arg3[%c0, %c0_0, %c0_1, %c0_2] : memref<1x1x4x64xf32, #tpu.memory_space<vmem>>, vector<1x1x4x64xf32>
    %1 = vector.shape_cast %0 : vector<1x1x4x64xf32> to vector<4x64xf32>
    %c0_3 = arith.constant 0 : index
    %c0_4 = arith.constant 0 : index
    %c0_5 = arith.constant 0 : index
    %2 = vector.load %arg4[%c0_3, %c0_4, %c0_5] : memref<1x4x4xf32, #tpu.memory_space<vmem>>, vector<1x4x4xf32>
    %3 = vector.shape_cast %2 : vector<1x4x4xf32> to vector<4x4xf32>
    %4 = vector.extract_strided_slice %3 {offsets = [0, 0], sizes = [4, 1], strides = [1, 1]} : vector<4x4xf32> to vector<4x1xf32>
    %5 = vector.extract_strided_slice %1 {offsets = [0, 0], sizes = [1, 64], strides = [1, 1]} : vector<4x64xf32> to vector<1x64xf32>
    %6 = vector.broadcast %4 : vector<4x1xf32> to vector<4x64xf32>
    %7 = vector.broadcast %5 : vector<1x64xf32> to vector<4x64xf32>
    %8 = arith.mulf %6, %7 : vector<4x64xf32>
    %9 = vector.extract_strided_slice %3 {offsets = [0, 1], sizes = [4, 1], strides = [1, 1]} : vector<4x4xf32> to vector<4x1xf32>
    %10 = vector.extract_strided_slice %1 {offsets = [1, 0], sizes = [1, 64], strides = [1, 1]} : vector<4x64xf32> to vector<1x64xf32>
    %11 = vector.broadcast %9 : vector<4x1xf32> to vector<4x64xf32>
    %12 = vector.broadcast %10 : vector<1x64xf32> to vector<4x64xf32>
    %13 = arith.mulf %11, %12 : vector<4x64xf32>
    %14 = arith.addf %8, %13 : vector<4x64xf32>
    %15 = vector.extract_strided_slice %3 {offsets = [0, 2], sizes = [4, 1], strides = [1, 1]} : vector<4x4xf32> to vector<4x1xf32>
    %16 = vector.extract_strided_slice %1 {offsets = [2, 0], sizes = [1, 64], strides = [1, 1]} : vector<4x64xf32> to vector<1x64xf32>
    %17 = vector.broadcast %15 : vector<4x1xf32> to vector<4x64xf32>
    %18 = vector.broadcast %16 : vector<1x64xf32> to vector<4x64xf32>
    %19 = arith.mulf %17, %18 : vector<4x64xf32>
    %20 = arith.addf %14, %19 : vector<4x64xf32>
    %21 = vector.extract_strided_slice %3 {offsets = [0, 3], sizes = [4, 1], strides = [1, 1]} : vector<4x4xf32> to vector<4x1xf32>
    %22 = vector.extract_strided_slice %1 {offsets = [3, 0], sizes = [1, 64], strides = [1, 1]} : vector<4x64xf32> to vector<1x64xf32>
    %23 = vector.broadcast %21 : vector<4x1xf32> to vector<4x64xf32>
    %24 = vector.broadcast %22 : vector<1x64xf32> to vector<4x64xf32>
    %25 = arith.mulf %23, %24 : vector<4x64xf32>
    %26 = arith.addf %20, %25 : vector<4x64xf32>
    %c0_6 = arith.constant 0 : index
    %c0_7 = arith.constant 0 : index
    %c0_8 = arith.constant 0 : index
    %c0_9 = arith.constant 0 : index
    %27 = vector.load %arg5[%c0_6, %c0_7, %c0_8, %c0_9] : memref<1x1x4x64xf32, #tpu.memory_space<vmem>>, vector<1x1x4x64xf32>
    %28 = vector.shape_cast %27 : vector<1x1x4x64xf32> to vector<4x64xf32>
    %29 = vector.shape_cast %26 : vector<4x64xf32> to vector<1x1x4x64xf32>
    tpu.vector_store %arg5[%c0_6, %c0_7, %c0_8, %c0_9], %29 {strides = array<i32>} : memref<1x1x4x64xf32, #tpu.memory_space<vmem>>, vector<1x1x4x64xf32>,
    return
  }
  func.func @transform_0(%arg0: i32, %arg1: i32, %arg2: i32) -> (i32, i32, i32, i32) {
    %c0_i32 = arith.constant 0 : i32
    %c0_i32_0 = arith.constant 0 : i32
    return %arg0, %arg1, %c0_i32, %arg2 : i32, i32, i32, i32
  }
  func.func @transform_1(%arg0: i32, %arg1: i32, %arg2: i32) -> (i32, i32, i32) {
    %c0_i32 = arith.constant 0 : i32
    %c0_i32_0 = arith.constant 0 : i32
    %c0_i32_1 = arith.constant 0 : i32
    return %arg1, %c0_i32, %c0_i32_0 : i32, i32, i32
  }
  func.func @transform_2(%arg0: i32, %arg1: i32, %arg2: i32) -> (i32, i32, i32, i32) {
    %c0_i32 = arith.constant 0 : i32
    %c0_i32_0 = arith.constant 0 : i32
    return %arg0, %arg1, %c0_i32, %arg2 : i32, i32, i32, i32
  }
}

</mosaic_0001>

<llo_original>
// kernel: tpu_custom_call.1
$region0: #{tpu_custom_call.1}
  #allocation0 [shape = 'u32[]', space=smem, size = 0x4, offset = 0x4, fixed_abs, tag = 'smem constant byte address 0x4 - core index']
  #allocation1 [shape = 'u32[144,128]{1,0:T(1,128)}', space=vmem, size = 0x12000, scoped, tag = 'internal scratch']
  %s0 = inlined_call_operand.hbm [shape: f32[2,4,4,64], index: 0, kind: input, shape index: {}]
  %s1 = inlined_call_operand.hbm [shape: f32[4,4,4], index: 1, kind: input, shape index: {}]
  %s2 = inlined_call_operand.hbm [shape: f32[2,4,4,64], index: 2, kind: output, shape index: {}]
  %s3 = sld [smem:[#allocation0]]
  $region49: #{tpu_custom_call.1} parent=0
    _
  %s5 = ssub.s32 1, %s3
  %s6 = scalar_select 0, %s5, %s3
  $region1: #{tpu_custom_call.1} parent=0
    #allocation2 [shape = 'u8[4096]{0}', space=vmem, size = 0x1000, scoped, tag = 'input window, operand 0']
    #allocation3 [shape = 's32[2]{0}', space=sflag, size = 0x8, scoped, tag = 'scoped memory for tpu_custom_call.1']
    #allocation4 [shape = 's32[2]{0}', space=sflag, size = 0x8, scoped, tag = 'scoped memory for tpu_custom_call.1']
    #allocation5 [shape = 'u8[4096]{0}', space=vmem, size = 0x1000, scoped, tag = 'input window, operand 1']
    #allocation6 [shape = 's32[2]{0}', space=sflag, size = 0x8, scoped, tag = 'scoped memory for tpu_custom_call.1']
    #allocation7 [shape = 'u8[4096]{0}', space=vmem, size = 0x1000, scoped, tag = 'output window, operand 0']
    %7 = vsyncpa [#allocation3], 0
    %s8 = scalar_lea.sflag [#allocation3], 1
    %9 = vsyncpa %s8, 0
    %10 = vsyncpa [#allocation6], 0
    %s11 = scalar_lea.sflag [#allocation6], 1
    %12 = vsyncpa %s11, 0
    %13 = vsyncpa [#allocation4], 0
    %s14 = scalar_lea.sflag [#allocation4], 1
    %15 = vsyncpa %s14, 0
    loop: start=0, step=1, limit=10
    $region2: #{tpu_custom_call.1} parent=1 // loop_pre_header
      _
    $region3: #{tpu_custom_call.1} parent=1 // loop_header
      %s17 = sphi 0, %s21
      %p18 = scmp.ge.s32.totalorder %s17, 10
      %s24 = sphi 0, %s43
      %s25 = sphi 0, %s39
      %s26 = sphi 0, %s35
      %s27 = sphi 0, %s24
      %s28 = sphi 0, %s25
      %s29 = sphi 0, %s26
      %s30 = sphi 0, %s27
      %s31 = sphi 0, %s28
      %s32 = sphi 0, %s29
      %s50 = sphi 0, %s52
      %s53 = sphi 0, %s50
      %s54 = sphi 0, %s53
      %s70 = sphi 0, %s54
      %s76 = sphi 0, %s78
      %s79 = sphi 0, %s76
      %s80 = sphi 0, %s79
      %s96 = sphi 0, %s80
      %s106 = sphi 0, %s108
      %s109 = sphi 0, %s106
      %s110 = sphi 0, %s109
      %s126 = sphi 0, %s110
    $region4: #{tpu_custom_call.1} parent=1 // loop_header_branch
      %20 = sbr.rel (%p18) target = $region8
    $region5: #{tpu_custom_call.1} parent=1 // loop_body
      %s22 = ssub.s32 %s17, 1
      %s23 = ssub.s32 %s17, 2
      %s33 = sadd.s32 1, %s26
      %p34 = scmp.ge.s32.totalorder %s33, 1
      %s35 = scalar_select %p34, 0, %s33
      %s36 = sadd.s32 1, %s25
      %s37 = scalar_select %p34, %s36, %s25
      %p38 = scmp.ge.s32.totalorder %s37, 4
      %s39 = scalar_select %p38, 0, %s37
      %s40 = sadd.s32 1, %s24
      %s41 = scalar_select %p38, %s40, %s24
      %p42 = scmp.ge.s32.totalorder %s41, 2
      %s43 = scalar_select %p42, 0, %s41
      %s44 = ssub.s32 %s24, %s43
      %s45 = ssub.s32 %s25, %s39
      %s46 = sor.u32 %s44, %s45
      %s47 = ssub.s32 %s26, %s35
      %s48 = sor.u32 %s46, %s47
      %p49 = scmp.eq.s32.totalorder %s48, 0
      %s51 = sadd.s32 %s50, 1
      %s52 = scalar_select %p49, %s50, %s51
      %p55 = pneg %p49
      %p56 = scmp.eq.s32.totalorder %s17, 7
      %p57 = por %p55, %p56
      %p58 = scmp.ne.s32.totalorder %s50, %s53
      %p59 = scmp.eq.s32.totalorder %s17, 0
      %p60 = por %p58, %p59
      %p61 = scmp.ne.s32.totalorder %s50, %s53
      %p62 = scmp.eq.s32.totalorder %s22, 7
      %p63 = por %p61, %p62
      %p64 = scmp.ne.s32.totalorder %s53, %s54
      %p65 = scmp.eq.s32.totalorder %s22, 0
      %p66 = por %p64, %p65
      %p67 = scmp.ne.s32.totalorder %s53, %s54
      %p68 = scmp.eq.s32.totalorder %s23, 7
      %p69 = por %p67, %p68
      %p71 = scmp.ne.s32.totalorder %s54, %s70
      %p72 = scmp.eq.s32.totalorder %s23, 0
      %p73 = por %p71, %p72
      %s74 = ssub.s32 %s25, %s39
      %p75 = scmp.eq.s32.totalorder %s74, 0
      %s77 = sadd.s32 %s76, 1
      %s78 = scalar_select %p75, %s76, %s77
      %p81 = pneg %p75
      %p82 = scmp.eq.s32.totalorder %s17, 7
      %p83 = por %p81, %p82
      %p84 = scmp.ne.s32.totalorder %s76, %s79
      %p85 = scmp.eq.s32.totalorder %s17, 0
      %p86 = por %p84, %p85
      %p87 = scmp.ne.s32.totalorder %s76, %s79
      %p88 = scmp.eq.s32.totalorder %s22, 7
      %p89 = por %p87, %p88
      %p90 = scmp.ne.s32.totalorder %s79, %s80
      %p91 = scmp.eq.s32.totalorder %s22, 0
      %p92 = por %p90, %p91
      %p93 = scmp.ne.s32.totalorder %s79, %s80
      %p94 = scmp.eq.s32.totalorder %s23, 7
      %p95 = por %p93, %p94
      %p97 = scmp.ne.s32.totalorder %s80, %s96
      %p98 = scmp.eq.s32.totalorder %s23, 0
      %p99 = por %p97, %p98
      %s100 = ssub.s32 %s24, %s43
      %s101 = ssub.s32 %s25, %s39
      %s102 = sor.u32 %s100, %s101
      %s103 = ssub.s32 %s26, %s35
      %s104 = sor.u32 %s102, %s103
      %p105 = scmp.eq.s32.totalorder %s104, 0
      %s107 = sadd.s32 %s106, 1
      %s108 = scalar_select %p105, %s106, %s107
      %p111 = pneg %p105
      %p112 = scmp.eq.s32.totalorder %s17, 7
      %p113 = por %p111, %p112
      %p114 = scmp.ne.s32.totalorder %s106, %s109
      %p115 = scmp.eq.s32.totalorder %s17, 0
      %p116 = por %p114, %p115
      %p117 = scmp.ne.s32.totalorder %s106, %s109
      %p118 = scmp.eq.s32.totalorder %s22, 7
      %p119 = por %p117, %p118
      %p120 = scmp.ne.s32.totalorder %s109, %s110
      %p121 = scmp.eq.s32.totalorder %s22, 0
      %p122 = por %p120, %p121
      %p123 = scmp.ne.s32.totalorder %s109, %s110
      %p124 = scmp.eq.s32.totalorder %s23, 7
      %p125 = por %p123, %p124
      %p127 = scmp.ne.s32.totalorder %s110, %s126
      %p128 = scmp.eq.s32.totalorder %s23, 0
      %p129 = por %p127, %p128
      %p130 = scmp.le.s32.totalorder 1, %s17
      %p131 = scmp.lt.s32.totalorder %s17, 9
      %p132 = pnand %p130, %p131
      %p133 = pneg %p132
      // Predicated region
      $region9: #{tpu_custom_call.1} parent=5 // pred_check
        _
      $region10: #{tpu_custom_call.1} parent=5 // pred_check_branch
        %135 = sbr.rel (%p132) target = $region12
      $region11: #{tpu_custom_call.1} parent=5 // pred_region
        %s136 = ssub.s32 %s17, 1
      $region12: #{tpu_custom_call.1} parent=5 // pred_fallthru
        _
      %p137 = scmp.lt.s32.totalorder %s17, 8
      // Predicated region
      $region13: #{tpu_custom_call.1} parent=5 // pred_check
        %p138 = pneg %p137
      $region14: #{tpu_custom_call.1} parent=5 // pred_check_branch
        %140 = sbr.rel (%p138) target = $region16
      $region15: #{tpu_custom_call.1} parent=5 // pred_region
        // Predicated region
        $region17: #{tpu_custom_call.1} parent=15 // pred_check
          %p141 = pneg %p60
        $region18: #{tpu_custom_call.1} parent=15 // pred_check_branch
          %143 = sbr.rel (%p141) target = $region20
        $region19: #{tpu_custom_call.1} parent=15 // pred_region
          %s144 = sand.u32 %s50, 1
          %s145 = scalar_lea.sflag [#allocation3], %s144
          %s146 = sand.u32 %s50, 1
          %s147 = smul.addr %s146, 4
          %s148 = scalar_lea.vmem [#allocation2], %s147
          %s150 = ssub.s32 64, 64
          %151 = vsyncadd %s145, %s150
          %s152 = sadd.s32 %s26, %s25
          %s153 = smul.addr %s24, 4
          %s154 = sadd.s32 %s152, %s153
          %s155 = smul.addr %s154, 64
          %s156 = scalar_lea.hbm %s0, %s155
          %s158 = sshll.u32 %s148, 4
          %s159 = int_to_ptr.vmem [resolvable:$true] %s158
          %161 = dma.hbm_to_vmem [thread:$0]  %s156, 64, %s159, %s145
        $region20: #{tpu_custom_call.1} parent=15 // pred_fallthru
          _
        // Predicated region
        $region21: #{tpu_custom_call.1} parent=15 // pred_check
          %p162 = pneg %p86
        $region22: #{tpu_custom_call.1} parent=15 // pred_check_branch
          %164 = sbr.rel (%p162) target = $region24
        $region23: #{tpu_custom_call.1} parent=15 // pred_region
          %s165 = sand.u32 %s76, 1
          %s166 = scalar_lea.sflag [#allocation6], %s165
          %s167 = sand.u32 %s76, 1
          %s168 = smul.addr %s167, 4
          %s169 = scalar_lea.vmem [#allocation5], %s168
          %s171 = ssub.s32 64, 64
          %172 = vsyncadd %s166, %s171
          %s173 = smul.addr %s25, 64
          %s174 = scalar_lea.hbm %s1, %s173
          %s176 = sshll.u32 %s169, 4
          %s177 = int_to_ptr.vmem [resolvable:$true] %s176
          %179 = dma.hbm_to_vmem [thread:$0]  %s174, 64, %s177, %s166
        $region24: #{tpu_custom_call.1} parent=15 // pred_fallthru
          _
      $region16: #{tpu_custom_call.1} parent=5 // pred_fallthru
        _
      %p180 = scmp.le.s32.totalorder 1, %s17
      %p181 = scmp.lt.s32.totalorder %s17, 9
      %p182 = pnand %p180, %p181
      %p183 = pneg %p182
      // Predicated region
      $region25: #{tpu_custom_call.1} parent=5 // pred_check
        _
      $region26: #{tpu_custom_call.1} parent=5 // pred_check_branch
        %185 = sbr.rel (%p182) target = $region28
      $region27: #{tpu_custom_call.1} parent=5 // pred_region
        %s186 = ssub.s32 %s17, 1
        %s187 = sand.u32 %s53, 1
        %s188 = scalar_lea.sflag [#allocation3], %s187
        %s189 = sand.u32 %s53, 1
        %s190 = smul.addr %s189, 4
        %s191 = scalar_lea.vmem [#allocation2], %s190
        // Predicated region
        $region29: #{tpu_custom_call.1} parent=27 // pred_check
          %p192 = pneg %p66
        $region30: #{tpu_custom_call.1} parent=27 // pred_check_branch
          %194 = sbr.rel (%p192) target = $region32
        $region31: #{tpu_custom_call.1} parent=27 // pred_region
          %195 = dma.done %s188, 64
        $region32: #{tpu_custom_call.1} parent=27 // pred_fallthru
          _
        %s196 = sand.u32 %s79, 1
        %s197 = scalar_lea.sflag [#allocation6], %s196
        %s198 = sand.u32 %s79, 1
        %s199 = smul.addr %s198, 4
        %s200 = scalar_lea.vmem [#allocation5], %s199
        // Predicated region
        $region33: #{tpu_custom_call.1} parent=27 // pred_check
          %p201 = pneg %p92
        $region34: #{tpu_custom_call.1} parent=27 // pred_check_branch
          %203 = sbr.rel (%p201) target = $region36
        $region35: #{tpu_custom_call.1} parent=27 // pred_region
          %204 = dma.done %s197, 64
        $region36: #{tpu_custom_call.1} parent=27 // pred_fallthru
          _
        %s205 = sand.u32 %s53, 1
        %s206 = scalar_lea.sflag [#allocation3], %s205
        %s207 = sand.u32 %s53, 1
        %s208 = smul.addr %s207, 4
        %s209 = scalar_lea.vmem [#allocation2], %s208
        %p210 = pneg %p66
        %p211 = pneg %p63
        %s212 = sand.u32 %s79, 1
        %s213 = scalar_lea.sflag [#allocation6], %s212
        %s214 = sand.u32 %s79, 1
        %s215 = smul.addr %s214, 4
        %s216 = scalar_lea.vmem [#allocation5], %s215
        %p217 = pneg %p92
        %p218 = pneg %p89
        %p219 = pneg %p122
        %p220 = pneg %p119
        %s221 = sand.u32 %s109, 1
        %s222 = scalar_lea.sflag [#allocation4], %s221
        %s223 = sand.u32 %s109, 1
        %s224 = smul.addr %s223, 4
        %s225 = scalar_lea.vmem [#allocation7], %s224
        %v226 = vld [vmem:[%s191] sm:$0xf]
        %v227 = vld [vmem:[%s200] sm:$0xf]
        %229 = vset.pattern.permute.xlu0 0
        %230 = vperm.xlu0 %229, %v227
        %v231 = vpop.permute.xlu0 %230
        %v233 = vlaneseq
        %v234 = vshrl.u32 %v233, 7
        %v235 = vsub.s32 0, %v234
        %v236 = vrot.slane %v226, %v235
        %v237 = vmul.f32 %v231, %v236
        %238 = vset.pattern.permute.xlu0 1
        %239 = vperm.xlu0 %238, %v227
        %v240 = vpop.permute.xlu0 %239
        %v242 = vlaneseq
        %v243 = vshrl.u32 %v242, 7
        %v244 = vsub.s32 1, %v243
        %v245 = vrot.slane %v226, %v244
        %v246 = vmul.f32 %v240, %v245
        %v247 = vadd.f32 %v237, %v246
        %248 = vset.pattern.permute.xlu0 2
        %249 = vperm.xlu0 %248, %v227
        %v250 = vpop.permute.xlu0 %249
        %v252 = vlaneseq
        %v253 = vshrl.u32 %v252, 7
        %v254 = vsub.s32 2, %v253
        %v255 = vrot.slane %v226, %v254
        %v256 = vmul.f32 %v250, %v255
        %v257 = vadd.f32 %v247, %v256
        %258 = vset.pattern.permute.xlu0 3
        %259 = vperm.xlu0 %258, %v227
        %v260 = vpop.permute.xlu0 %259
        %v262 = vlaneseq
        %v263 = vshrl.u32 %v262, 7
        %v264 = vsub.s32 3, %v263
        %v265 = vrot.slane %v226, %v264
        %v266 = vmul.f32 %v260, %v265
        %v267 = vadd.f32 %v257, %v266
        %vm268 = vcmask 519168
        %269 = vst.msk [vmem:[%s225] sm:$0xf] %vm268, %v267
        %s270 = sand.u32 %s109, 1
        %s271 = scalar_lea.sflag [#allocation4], %s270
        %s272 = sand.u32 %s109, 1
        %s273 = smul.addr %s272, 4
        %s274 = scalar_lea.vmem [#allocation7], %s273
        // Predicated region
        $region37: #{tpu_custom_call.1} parent=27 // pred_check
          %p275 = pneg %p119
        $region38: #{tpu_custom_call.1} parent=27 // pred_check_branch
          %277 = sbr.rel (%p275) target = $region40
        $region39: #{tpu_custom_call.1} parent=27 // pred_region
          %s279 = ssub.s32 64, 64
          %280 = vsyncadd %s271, %s279
          %s281 = sadd.s32 %s29, %s28
          %s282 = smul.addr %s27, 4
          %s283 = sadd.s32 %s281, %s282
          %s284 = smul.addr %s283, 64
          %s285 = scalar_lea.hbm %s2, %s284
          %s287 = sshll.u32 %s274, 4
          %s288 = int_to_ptr.vmem [resolvable:$true] %s287
          %290 = dma.vmem_to_hbm [thread:$0]  %s288, 64, %s285, %s271
        $region40: #{tpu_custom_call.1} parent=27 // pred_fallthru
          _
      $region28: #{tpu_custom_call.1} parent=5 // pred_fallthru
        _
      %p291 = scmp.le.s32.totalorder 2, %s17
      // Predicated region
      $region41: #{tpu_custom_call.1} parent=5 // pred_check
        %p292 = pneg %p291
      $region42: #{tpu_custom_call.1} parent=5 // pred_check_branch
        %294 = sbr.rel (%p292) target = $region44
      $region43: #{tpu_custom_call.1} parent=5 // pred_region
        %s295 = ssub.s32 %s17, 2
        // Predicated region
        $region45: #{tpu_custom_call.1} parent=43 // pred_check
          %p296 = pneg %p125
        $region46: #{tpu_custom_call.1} parent=43 // pred_check_branch
          %298 = sbr.rel (%p296) target = $region48
        $region47: #{tpu_custom_call.1} parent=43 // pred_region
          %s299 = sand.u32 %s110, 1
          %s300 = scalar_lea.sflag [#allocation4], %s299
          %s301 = sand.u32 %s110, 1
          %s302 = smul.addr %s301, 4
          %s303 = scalar_lea.vmem [#allocation7], %s302
          %304 = dma.done %s300, 64
        $region48: #{tpu_custom_call.1} parent=43 // pred_fallthru
          _
      $region44: #{tpu_custom_call.1} parent=5 // pred_fallthru
        _
    $region6: #{tpu_custom_call.1} parent=1 // loop_footer
      %s21 = sadd.s32 1, %s17
    $region7: #{tpu_custom_call.1} parent=1 // loop_footer_branch
      %16 = sbr.rel target = $region3
    $region8: #{tpu_custom_call.1} parent=1 // loop_exit
      _
    %305 = vsyncpa [#allocation3], 1
    %s306 = scalar_lea.sflag [#allocation3], 1
    %307 = vsyncpa %s306, 1
    %308 = vsyncpa [#allocation6], 1
    %s309 = scalar_lea.sflag [#allocation6], 1
    %310 = vsyncpa %s309, 1
    %311 = vsyncpa [#allocation4], 1
    %s312 = scalar_lea.sflag [#allocation4], 1
    %313 = vsyncpa %s312, 1

</llo_original>
